<compile_context>
chip_gen: v7x
topology: tpu7x:2x2x1
jax: 0.10.0
libtpu: 0.0.40
codegen_flags: <defaults>
</compile_context>

<pallas_src>
import jax
import jax.numpy as jnp
from jax import lax
from jax.experimental import pallas as pl
from jax.experimental.pallas import tpu as pltpu


def _logreg_fwd_kernel(x_ref, w_ref, b_ref, o_ref):
    # x_ref: (TN, D), w_ref: (C, D), b_ref: (1, C), o_ref: (TN, C)
    x = x_ref[...]
    w = w_ref[...]
    # logits = X @ W.T + b, expressed as a contraction over D of both operands
    # (feeds the MXU directly, no in-kernel transpose of W).
    logits = lax.dot_general(
        x, w,
        dimension_numbers=(((1,), (1,)), ((), ())),
        preferred_element_type=jnp.float32,
    )
    logits = logits + b_ref[...]          # broadcast (1, C) over rows
    # numerically stable softmax along the class axis (dim=1)
    m = jnp.max(logits, axis=1, keepdims=True)
    e = jnp.exp(logits - m)
    denom = jnp.sum(e, axis=1, keepdims=True)
    # exact reciprocal to keep the 1e-5 tolerance vs the reference
    o_ref[...] = (e * pl.reciprocal(denom, approx=False)).astype(o_ref.dtype)


def _pick_row_tile(N, D):
    """Row tile TN: as large as possible up to 512, multiple of 8, and such
    that the double-buffered f32 X block stays within ~8 MiB."""
    if N <= 512:
        return N  # single block covers the full batch (full-dim block is legal)
    budget = 8 * 1024 * 1024            # bytes for 2x (TN, D) f32 buffers
    tn = budget // (2 * D * 4)
    tn = max(8, min(512, (tn // 8) * 8))
    return int(tn)


def pt_logreg_forward(x, w, b):
    """softmax(X @ W.T + b, axis=1) via a row-tiled Pallas TPU kernel.

    x: (N, D) float32, w: (C, D) float32, b: (C,) float32 -> (N, C) float32
    """
    N, D = x.shape
    C, Dw = w.shape
    assert D == Dw
    b2 = b.reshape(1, C).astype(jnp.float32)
    x = x.astype(jnp.float32)
    w = w.astype(jnp.float32)

    TN = _pick_row_tile(N, D)
    grid = (pl.cdiv(N, TN),)

    # Conservative VMEM accounting: double-buffered X + out blocks, resident
    # W + b (also double-buffered by the pipeline), plus headroom.
    need = 4 * (2 * TN * D + 2 * TN * C + 2 * C * D + 2 * C)
    vmem_limit = int(min(max(2 * need, 16 * 1024 * 1024), 48 * 1024 * 1024))

    return pl.pallas_call(
        _logreg_fwd_kernel,
        out_shape=jax.ShapeDtypeStruct((N, C), jnp.float32),
        grid_spec=pltpu.PrefetchScalarGridSpec(
            num_scalar_prefetch=0,
            grid=grid,
            in_specs=[
                pl.BlockSpec((TN, D), lambda i: (i, 0)),   # X: tiled over rows
                pl.BlockSpec((C, D), lambda i: (0, 0)),    # W: resident
                pl.BlockSpec((1, C), lambda i: (0, 0)),    # b: resident
            ],
            out_specs=pl.BlockSpec((TN, C), lambda i: (i, 0)),
        ),
        compiler_params=pltpu.CompilerParams(
            dimension_semantics=("parallel",),   # rows are independent
            vmem_limit_bytes=vmem_limit,
        ),
    )(x, w, b2)


def _reference_forward(x, w, b):
    logits = x @ w.T + b[None, :]
    return jax.nn.softmax(logits, axis=1)


if __name__ == "__main__":
    # PTLogreg(D, C): W ~ randn(C, D), b = zeros(C)
    N, D, C = 8, 32, 10

    key = jax.random.PRNGKey(0)
    kx, kw = jax.random.split(key)
    x = jax.random.normal(kx, (N, D), dtype=jnp.float32)
    W = jax.random.normal(kw, (C, D), dtype=jnp.float32)   # randn init
    b = jnp.zeros((C,), dtype=jnp.float32)                 # zeros init

    probs = pt_logreg_forward(x, W, b)
    probs = jax.block_until_ready(probs)

    ref = _reference_forward(x, W, b)
    assert probs.shape == (N, C)
    assert jnp.allclose(probs, ref, atol=1e-5, rtol=1e-5), "mismatch vs reference"
    assert jnp.allclose(jnp.sum(probs, axis=1), 1.0, atol=1e-5), "rows must sum to 1"

    print("KERNEL_OK")
</pallas_src>

<mosaic_0001>
module attributes {stable_mosaic.version = 11 : i64} {
  func.func @_logreg_fwd_kernel(%arg0: i32, %arg1: memref<8x32xf32, #tpu.memory_space<vmem>>, %arg2: memref<10x32xf32, #tpu.memory_space<vmem>>, %arg3: memref<1x10xf32, #tpu.memory_space<vmem>>, %arg4: memref<8x10xf32, #tpu.memory_space<vmem>>) attributes {dimension_semantics = [#tpu.dimension_semantics<parallel>], iteration_bounds = array<i64: 1>, scalar_prefetch = 0 : i64, scratch_operands = 0 : i64, tpu.core_type = #tpu.core_type<tc>, window_params = [{transform_indices = @transform_0, window_bounds = array<i64: 8, 32>}, {pipeline_mode = #tpu.pipeline_mode<synchronous>, transform_indices = @transform_1, window_bounds = array<i64: 10, 32>}, {pipeline_mode = #tpu.pipeline_mode<synchronous>, transform_indices = @transform_2, window_bounds = array<i64: 1, 10>}, {transform_indices = @transform_3, window_bounds = array<i64: 8, 10>}]} {
    %c0 = arith.constant 0 : index
    %c0_0 = arith.constant 0 : index
    %0 = vector.load %arg1[%c0, %c0_0] : memref<8x32xf32, #tpu.memory_space<vmem>>, vector<8x32xf32>
    %c0_1 = arith.constant 0 : index
    %c0_2 = arith.constant 0 : index
    %1 = vector.load %arg2[%c0_1, %c0_2] : memref<10x32xf32, #tpu.memory_space<vmem>>, vector<10x32xf32>
    %cst = arith.constant dense<0.000000e+00> : vector<8x10xf32>
    %2 = tpu.matmul %0, %1, %cst {dimension_numbers = #tpu.dot_dimension_numbers<[1], [1], [0], [0], [0, 0, 1, 0], [], []>} : vector<8x32xf32>, vector<10x32xf32>, vector<8x10xf32> -> vector<8x10xf32>
    %c0_3 = arith.constant 0 : index
    %c0_4 = arith.constant 0 : index
    %3 = vector.load %arg3[%c0_3, %c0_4] : memref<1x10xf32, #tpu.memory_space<vmem>>, vector<1x10xf32>
    %4 = vector.broadcast %3 : vector<1x10xf32> to vector<8x10xf32>
    %5 = arith.addf %2, %4 : vector<8x10xf32>
    %cst_5 = arith.constant dense<0xFF800000> : vector<8xf32>
    %6 = vector.multi_reduction <maximumf>, %5, %cst_5 [1] : vector<8x10xf32> to vector<8xf32>
    %7 = vector.shape_cast %6 : vector<8xf32> to vector<8x1xf32>
    %8 = vector.broadcast %7 : vector<8x1xf32> to vector<8x10xf32>
    %9 = arith.subf %5, %8 : vector<8x10xf32>
    %10 = math.exp %9 : vector<8x10xf32>
    %cst_6 = arith.constant dense<0.000000e+00> : vector<8xf32>
    %11 = vector.multi_reduction <add>, %10, %cst_6 [1] : vector<8x10xf32> to vector<8xf32>
    %12 = vector.shape_cast %11 : vector<8xf32> to vector<8x1xf32>
    %13 = tpu.reciprocal %12 : vector<8x1xf32> -> vector<8x1xf32>
    %14 = vector.broadcast %13 : vector<8x1xf32> to vector<8x10xf32>
    %15 = arith.mulf %10, %14 : vector<8x10xf32>
    %c0_7 = arith.constant 0 : index
    %c0_8 = arith.constant 0 : index
    %16 = vector.load %arg4[%c0_7, %c0_8] : memref<8x10xf32, #tpu.memory_space<vmem>>, vector<8x10xf32>
    tpu.vector_store %arg4[%c0_7, %c0_8], %15 {strides = array<i32>} : memref<8x10xf32, #tpu.memory_space<vmem>>, vector<8x10xf32>,
    return
  }
  func.func @transform_0(%arg0: i32) -> (i32, i32) {
    %c0_i32 = arith.constant 0 : i32
    %c0_i32_0 = arith.constant 0 : i32
    return %arg0, %c0_i32 : i32, i32
  }
  func.func @transform_1(%arg0: i32) -> (i32, i32) {
    %c0_i32 = arith.constant 0 : i32
    %c0_i32_0 = arith.constant 0 : i32
    %c0_i32_1 = arith.constant 0 : i32
    return %c0_i32, %c0_i32_0 : i32, i32
  }
  func.func @transform_2(%arg0: i32) -> (i32, i32) {
    %c0_i32 = arith.constant 0 : i32
    %c0_i32_0 = arith.constant 0 : i32
    %c0_i32_1 = arith.constant 0 : i32
    return %c0_i32, %c0_i32_0 : i32, i32
  }
  func.func @transform_3(%arg0: i32) -> (i32, i32) {
    %c0_i32 = arith.constant 0 : i32
    %c0_i32_0 = arith.constant 0 : i32
    return %arg0, %c0_i32 : i32, i32
  }
}

</mosaic_0001>

<llo_original>
// kernel: tpu_custom_call.1
$region0: #{tpu_custom_call.1}
  #allocation0 [shape = 'u32[]', space=smem, size = 0x4, offset = 0x4, fixed_abs, tag = 'smem constant byte address 0x4 - core index']
  #allocation1 [shape = 'u32[144,128]{1,0:T(1,128)}', space=vmem, size = 0x12000, scoped, tag = 'internal scratch']
  %s0 = inlined_call_operand.hbm [shape: f32[8,32], index: 0, kind: input, shape index: {}]
  %s1 = inlined_call_operand.hbm [shape: f32[10,32], index: 1, kind: input, shape index: {}]
  %s2 = inlined_call_operand.vmem [shape: f32[1,10], index: 2, kind: input, shape index: {}]
  %s3 = inlined_call_operand.hbm [shape: f32[8,10], index: 3, kind: output, shape index: {}]
  %s4 = sld [smem:[#allocation0]]
  $region30: #{tpu_custom_call.1} parent=0
    _
  %s6 = ssub.s32 1, %s4
  %s7 = scalar_select 0, %s6, %s4
  $region1: #{tpu_custom_call.1} parent=0
    #allocation2 [shape = 'u8[4096]{0}', space=vmem, size = 0x1000, scoped, tag = 'input window, operand 0, single buffered']
    #allocation3 [shape = 's32[1]{0}', space=sflag, size = 0x4, scoped, tag = 'scoped memory for tpu_custom_call.1']
    #allocation4 [shape = 's32[1]{0}', space=sflag, size = 0x4, scoped, tag = 'scoped memory for tpu_custom_call.1']
    #allocation5 [shape = 'u8[8192]{0}', space=vmem, size = 0x2000, scoped, tag = 'input window, operand 1, single buffered']
    #allocation6 [shape = 's32[1]{0}', space=sflag, size = 0x4, scoped, tag = 'scoped memory for tpu_custom_call.1']
    #allocation7 [shape = 'u8[4096]{0}', space=vmem, size = 0x1000, scoped, tag = 'output window, operand 0, single buffered']
    %8 = vsyncpa [#allocation3], 0
    %9 = vsyncpa [#allocation6], 0
    %10 = vsyncpa [#allocation4], 0
    // Predicated region
    $region2: #{tpu_custom_call.1} parent=1 // pred_check
      _
    $region3: #{tpu_custom_call.1} parent=1 // pred_check_branch
      %12 = sbr.rel (0) target = $region5
    $region4: #{tpu_custom_call.1} parent=1 // pred_region
      %s14 = ssub.s32 128, 128
      %15 = vsyncadd [#allocation3], %s14
      %s17 = sshll.u32 [#allocation2], 4
      %s18 = int_to_ptr.vmem [resolvable:$true] %s17
      %20 = dma.hbm_to_vmem [thread:$0]  %s0, 128, %s18, [#allocation3]
    $region5: #{tpu_custom_call.1} parent=1 // pred_fallthru
      _
    // Predicated region
    $region6: #{tpu_custom_call.1} parent=1 // pred_check
      _
    $region7: #{tpu_custom_call.1} parent=1 // pred_check_branch
      %22 = sbr.rel (0) target = $region9
    $region8: #{tpu_custom_call.1} parent=1 // pred_region
      %s24 = ssub.s32 256, 256
      %25 = vsyncadd [#allocation6], %s24
      %s26 = sshll.u32 [#allocation5], 4
      %s27 = int_to_ptr.vmem [resolvable:$true] %s26
      %32 = dma.hbm_to_vmem [thread:$0]  %s1, 256, %s27, [#allocation6], 128, 128, 8
    $region9: #{tpu_custom_call.1} parent=1 // pred_fallthru
      _
    // Predicated region
    $region10: #{tpu_custom_call.1} parent=1 // pred_check
      _
    $region11: #{tpu_custom_call.1} parent=1 // pred_check_branch
      %34 = sbr.rel (0) target = $region13
    $region12: #{tpu_custom_call.1} parent=1 // pred_region
      _
    $region13: #{tpu_custom_call.1} parent=1 // pred_fallthru
      _
    // Predicated region
    $region14: #{tpu_custom_call.1} parent=1 // pred_check
      _
    $region15: #{tpu_custom_call.1} parent=1 // pred_check_branch
      %36 = sbr.rel (0) target = $region17
    $region16: #{tpu_custom_call.1} parent=1 // pred_region
      %37 = dma.done [#allocation3], 128
    $region17: #{tpu_custom_call.1} parent=1 // pred_fallthru
      _
    // Predicated region
    $region18: #{tpu_custom_call.1} parent=1 // pred_check
      _
    $region19: #{tpu_custom_call.1} parent=1 // pred_check_branch
      %39 = sbr.rel (0) target = $region21
    $region20: #{tpu_custom_call.1} parent=1 // pred_region
      %40 = dma.done [#allocation6], 256
    $region21: #{tpu_custom_call.1} parent=1 // pred_fallthru
      _
    %v41 = vld [vmem:[#allocation2] sm:$0xff]
    %v42 = vld [vmem:[#allocation5] sm:$0xff]
    %v43 = vld [vmem:[#allocation5 + $0x8] sm:$0x3]
    %v44 = vld [vmem:[%s2] sm:$0x1]
    %v46 = vlaneseq
    %v47 = vshrl.u32 %v46, 7
    %v48 = vsub.s32 0, %v47
    %v49 = vrot.slane %v44, %v48
    %vm51 = vcmask 261120
    %v53 = vsel %vm51, %v41, 0
    %v56 = vsel %vm51, %v42, 0
    %v59 = vsel %vm51, %v43, 0
    %61 = vmatprep.subr.mxu0 0.0
    %62 = vmatpush1.xpose.msra.mxu0 %v56
    %63 = vmatprep.subr.mxu0 0.0
    %64 = vmatpush1.xpose.msra.mxu0 %v59
    %65 = vmatprep.subr.mxu0 0.0
    %66 = vmatpush1.xpose.msra.mxu0 0.0
    %67 = vmatprep.subr.mxu0 0.0
    %68 = vmatpush1.xpose.msra.mxu0 0.0
    %69 = vmatprep.subr.mxu0 0.0
    %70 = vmatpush1.xpose.msra.mxu0 0.0
    %71 = vmatprep.subr.mxu0 0.0
    %72 = vmatpush1.xpose.msra.mxu0 0.0
    %73 = vmatprep.subr.mxu0 0.0
    %74 = vmatpush1.xpose.msra.mxu0 0.0
    %75 = vmatprep.subr.mxu0 0.0
    %76 = vmatpush1.xpose.msra.mxu0 0.0
    %77 = vmatprep.subr.mxu0 0.0
    %78 = vmatpush1.xpose.msra.mxu0 0.0
    %79 = vmatprep.subr.mxu0 0.0
    %80 = vmatpush1.xpose.msra.mxu0 0.0
    %81 = vmatprep.subr.mxu0 0.0
    %82 = vmatpush1.xpose.msra.mxu0 0.0
    %83 = vmatprep.subr.mxu0 0.0
    %84 = vmatpush1.xpose.msra.mxu0 0.0
    %85 = vmatprep.subr.mxu0 0.0
    %86 = vmatpush1.xpose.msra.mxu0 0.0
    %87 = vmatprep.subr.mxu0 0.0
    %88 = vmatpush1.xpose.msra.mxu0 0.0
    %89 = vmatprep.subr.mxu0 0.0
    %90 = vmatpush1.xpose.msra.mxu0 0.0
    %91 = vmatprep.subr.mxu0 0.0
    %92 = vmatpush1.xpose.msra.mxu0 0.0
    %93 = vmatprep.subr.mxu0 0.0
    %94 = vmatpush1.xpose.msra.mxu0 0.0
    %95 = vmatprep.subr.mxu0 0.0
    %96 = vmatpush1.xpose.msra.mxu0 0.0
    %97 = vmatprep.subr.mxu0 0.0
    %98 = vmatpush1.xpose.msra.mxu0 0.0
    %99 = vmatprep.subr.mxu0 0.0
    %100 = vmatpush1.xpose.msra.mxu0 0.0
    %101 = vmatprep.subr.mxu0 0.0
    %102 = vmatpush1.xpose.msra.mxu0 0.0
    %103 = vmatprep.subr.mxu0 0.0
    %104 = vmatpush1.xpose.msra.mxu0 0.0
    %105 = vmatprep.subr.mxu0 0.0
    %106 = vmatpush1.xpose.msra.mxu0 0.0
    %107 = vmatprep.subr.mxu0 0.0
    %108 = vmatpush1.xpose.msra.mxu0 0.0
    %109 = vmatprep.subr.mxu0 0.0
    %110 = vmatpush1.xpose.msra.mxu0 0.0
    %111 = vmatprep.subr.mxu0 0.0
    %112 = vmatpush1.xpose.msra.mxu0 0.0
    %113 = vmatprep.subr.mxu0 0.0
    %114 = vmatpush1.xpose.msra.mxu0 0.0
    %115 = vmatprep.subr.mxu0 0.0
    %116 = vmatpush1.xpose.msra.mxu0 0.0
    %117 = vmatprep.subr.mxu0 0.0
    %118 = vmatpush1.xpose.msra.mxu0 0.0
    %119 = vmatprep.subr.mxu0 0.0
    %120 = vmatpush1.xpose.msra.mxu0 0.0
    %121 = vmatprep.subr.mxu0 0.0
    %122 = vmatpush1.xpose.msra.mxu0 0.0
    %123 = vmatprep.subr.mxu0 0.0
    %124 = vmatpush1.xpose.msra.mxu0 0.0
    %125 = vmatprep.mubr.f32.mxu0 0.0
    %126 = vmatmul.mubr.f32.gmra.mrb[0].mxu0 %v53
    %v127 = vpop.f32.mrb[0].mxu0
    %v128 = vadd.f32 %v49, %v127
    %v129 = vpop.f32.mrb[0].mxu0
    %130 = vdwg.mxu0
    %vm131 = vcmask 80896
    %v132 = vsel %vm131, %v128, -inf
    %133 = vmax.xlane.f32.xlu0 %v132
    %v134 = vpop.xlane.xlu0 %133
    %v135 = vsub.f32 %v128, %v134
    %v136 = vmul.f32 %v135, 1.442695
    %v137 = vpow.pop %v136
    %v138 = vsel %vm131, %v137, 0.0
    %139 = vadd.xlane.f32.xlu0 %v138
    %v140 = vpop.xlane.xlu0 %139
    %v141 = vrcp.pop %v140
    %v142 = vmul.f32 %v137, %v141
    %143 = vst.msk [vmem:[#allocation7] sm:$0xff] %vm131, %v142
    // Predicated region
    $region22: #{tpu_custom_call.1} parent=1 // pred_check
      _
    $region23: #{tpu_custom_call.1} parent=1 // pred_check_branch
      %145 = sbr.rel (0) target = $region25
    $region24: #{tpu_custom_call.1} parent=1 // pred_region
      %s147 = ssub.s32 128, 128
      %148 = vsyncadd [#allocation4], %s147
      %s150 = sshll.u32 [#allocation7], 4
      %s151 = int_to_ptr.vmem [resolvable:$true] %s150
      %153 = dma.vmem_to_hbm [thread:$0]  %s151, 128, %s3, [#allocation4]
    $region25: #{tpu_custom_call.1} parent=1 // pred_fallthru
      _
    // Predicated region
    $region26: #{tpu_custom_call.1} parent=1 // pred_check
      _
    $region27: #{tpu_custom_call.1} parent=1 // pred_check_branch
      %155 = sbr.rel (0) target = $region29
    $region28: #{tpu_custom_call.1} parent=1 // pred_region
      %156 = dma.done [#allocation4], 128
    $region29: #{tpu_custom_call.1} parent=1 // pred_fallthru
      _
    %157 = vsyncpa [#allocation3], 1
    %158 = vsyncpa [#allocation6], 1
    %159 = vsyncpa [#allocation4], 1

</llo_original>
